<compile_context>
chip_gen: v7x
topology: tpu7x:2x2x1
jax: 0.10.0
libtpu: 0.0.40
codegen_flags: <defaults>
</compile_context>

<pallas_src>
import jax
import jax.numpy as jnp
from jax.experimental import pallas as pl
from jax.experimental.pallas import tpu as pltpu


# ---------------------------------------------------------------------------
# helpers
# ---------------------------------------------------------------------------
def _round_up(x, m):
    return ((x + m - 1) // m) * m


def _pick_tile(n, candidates, min_steps=1):
    """Largest candidate that divides n with at least `min_steps` steps, else None."""
    for c in candidates:
        if c <= n and n % c == 0 and n // c >= min_steps:
            return c
    return None


def _vmem_limit_bytes():
    """Per-generation scoped VMEM limit: ~75% of physical, capped at 96 MiB.

    v5e/v6e (128 MiB physical) -> 96 MiB; v7x (64 MiB physical) -> 48 MiB.
    """
    try:
        cap = pltpu.get_tpu_info().vmem_capacity_bytes
    except Exception:
        cap = 64 * 1024 * 1024          # conservative (v7x-sized) fallback
    return min(int(cap * 3 // 4), 96 * 1024 * 1024)


# ---------------------------------------------------------------------------
# Fused single-kernel path (small S): exact direct-difference formulation.
# ---------------------------------------------------------------------------
def _fused_kernel(x_ref, proj_ref, o_ref):
    # x_ref: (1, S, D)   proj_ref: (D, R)   o_ref: (1, S, S)
    t = jnp.dot(x_ref[0], proj_ref[...],
                preferred_element_type=jnp.float32)        # (S, R) on the MXU
    d = t[:, None, :] - t[None, :, :]                      # (S, S, R)
    o_ref[0] = jnp.sum(d * d, axis=-1)                     # (S, S)


def _fused_probe(batch, proj):
    B, S, D = batch.shape
    _, R = proj.shape
    return pl.pallas_call(
        _fused_kernel,
        out_shape=jax.ShapeDtypeStruct((B, S, S), jnp.float32),
        grid_spec=pltpu.PrefetchScalarGridSpec(
            num_scalar_prefetch=0,
            grid=(B,),                                      # >=2 steps when B>=2 (megacore)
            in_specs=[
                pl.BlockSpec((1, S, D), lambda b: (b, 0, 0)),
                pl.BlockSpec((D, R), lambda b: (0, 0)),     # constant index map: resident
            ],
            out_specs=pl.BlockSpec((1, S, S), lambda b: (b, 0, 0)),
        ),
        compiler_params=pltpu.CompilerParams(
            dimension_semantics=("parallel",)),
    )(batch, proj)


# ---------------------------------------------------------------------------
# Stage 1 (large path): projection  t = batch @ proj,  B*S folded into M axis.
# ---------------------------------------------------------------------------
def _project_kernel(x_ref, proj_ref, t_ref):
    # x_ref: (TM, D)   proj_ref: (D, R) resident weight   t_ref: (TM, R)
    t_ref[...] = jnp.dot(x_ref[...], proj_ref[...],
                         preferred_element_type=jnp.float32)


def _project(batch2d, proj, tm, vmem_limit):
    BS, D = batch2d.shape
    _, R = proj.shape
    return pl.pallas_call(
        _project_kernel,
        out_shape=jax.ShapeDtypeStruct((BS, R), jnp.float32),
        grid_spec=pltpu.PrefetchScalarGridSpec(
            num_scalar_prefetch=0,
            grid=(BS // tm,),
            in_specs=[
                pl.BlockSpec((tm, D), lambda m: (m, 0)),
                pl.BlockSpec((D, R), lambda m: (0, 0)),     # constant index map: no re-DMA
            ],
            out_specs=pl.BlockSpec((tm, R), lambda m: (m, 0)),
        ),
        compiler_params=pltpu.CompilerParams(
            dimension_semantics=("parallel",),
            vmem_limit_bytes=vmem_limit),
    )(batch2d, proj)


# ---------------------------------------------------------------------------
# Stage 2 (large path): Gram-identity pairwise distances.
#   d_ij = ||t_i||^2 + ||t_j||^2 - 2 * t_i . t_j
# K-operand comes pre-transposed (B, R, Sp) and the row norms are hoisted, so
# the inner step is a single (TQ,R)@(R,TK) MXU matmul + a broadcast add.
# ---------------------------------------------------------------------------
def _pairwise_dist_kernel(tq_ref, tkT_ref, sqq_ref, sqk_ref, o_ref):
    # tq_ref: (bb, TQ, R)  tkT_ref: (bb, R, TK)  sqq: (bb, TQ, 1)  sqk: (bb, 1, TK)
    gram = jnp.einsum("bqr,brk->bqk", tq_ref[...], tkT_ref[...],
                      preferred_element_type=jnp.float32)   # MXU, no per-step relayout
    dist = (sqq_ref[...] + sqk_ref[...]) - 2.0 * gram
    # Cancellation can leave tiny negatives on/near the diagonal: clamp at 0.
    o_ref[...] = jnp.maximum(dist, 0.0)


# ---------------------------------------------------------------------------
# Public wrapper
# ---------------------------------------------------------------------------
def two_word_psd_probe(batch, proj):
    """batch: (B, S, D), proj: (D, R) -> (B, S, S) squared L2 distances (f32)."""
    B, S, D = batch.shape
    Dp, R = proj.shape
    assert D == Dp
    batch = batch.astype(jnp.float32)
    proj = proj.astype(jnp.float32)

    # ---- tiny-shape fast path: one launch, exact direct differences ----
    if S <= 128 and S * S * R * 4 <= (2 << 20) and S * D * 4 <= (4 << 20):
        return _fused_probe(batch, proj)

    vmem_limit = _vmem_limit_bytes()
    # Per-step footprint cap INCLUDING double-buffered inputs & output (2x live);
    # kept <= 40 MiB so the same tiling is valid on v7x's 64 MiB VMEM.
    tile_budget = min(int(vmem_limit * 0.85), 40 * 1024 * 1024)

    # ---- pad S to the 128-lane granule: unmasked lane-dense stores in stage 2 ----
    Sp = _round_up(S, 128)
    if Sp != S:
        batch = jnp.pad(batch, ((0, 0), (0, Sp - S), (0, 0)))

    # ---- stage 1: project once for the whole (padded) batch ----
    BSp = B * Sp
    tm = None
    for c in (1024, 512, 256, 128):
        if BSp % c == 0 and 2 * 4 * (c * D + c * R + D * R) <= tile_budget:
            tm = c
            break
    if tm is None:
        tm = 128 if BSp % 128 == 0 else BSp
    # TODO(synk): for very large D (>~16K) add a reduction grid axis over D with a
    # VMEM accumulator instead of holding the full (tm, D) strip.
    t = _project(batch.reshape(BSp, D), proj, tm, vmem_limit).reshape(B, Sp, R)

    # ---- wrapper-side layout plumbing on the small t array (<< output bytes) ----
    t_T = jnp.swapaxes(t, 1, 2)                 # (B, R, Sp): K operand, lane-dense in S
    sq = jnp.sum(t * t, axis=-1)                # (B, Sp): hoisted row norms
    sq_q = sq[:, :, None]                       # (B, Sp, 1)
    sq_k = sq[:, None, :]                       # (B, 1, Sp)

    # ---- stage 2: tiled pairwise distances ----
    tk = _pick_tile(Sp, (512, 256, 128))                          # lane axis (x128)
    min_q_steps = 2 if (B < 2 and Sp >= 256) else 1               # keep >=2 parallel steps
    tq = (_pick_tile(Sp, (512, 256, 128), min_steps=min_q_steps)
          or _pick_tile(Sp, (512, 256, 128)))

    bb = 1
    for c in range(1, B + 1):
        if B % c:
            continue
        if B >= 2 and B // c < 2:
            break                               # keep the batch axis shardable (v7x 2 TCs)
        live = 4 * c * (tq * R + R * tk + tq + tk + tq * tk)
        if 2 * live <= tile_budget:             # x2: double-buffered inputs AND output
            bb = c

    grid = (B // bb, Sp // tq, Sp // tk)
    out = pl.pallas_call(
        _pairwise_dist_kernel,
        out_shape=jax.ShapeDtypeStruct((B, Sp, Sp), jnp.float32),
        grid_spec=pltpu.PrefetchScalarGridSpec(
            num_scalar_prefetch=0,
            grid=grid,
            in_specs=[
                pl.BlockSpec((bb, tq, R), lambda b, i, j: (b, i, 0)),
                pl.BlockSpec((bb, R, tk), lambda b, i, j: (b, 0, j)),
                pl.BlockSpec((bb, tq, 1), lambda b, i, j: (b, i, 0)),
                pl.BlockSpec((bb, 1, tk), lambda b, i, j: (b, 0, j)),
            ],
            out_specs=pl.BlockSpec((bb, tq, tk), lambda b, i, j: (b, i, j)),
        ),
        compiler_params=pltpu.CompilerParams(
            dimension_semantics=("parallel", "parallel", "parallel"),
            vmem_limit_bytes=vmem_limit),
    )(t, t_T, sq_q, sq_k)

    return out[:, :S, :S] if Sp != S else out


def reference(batch, proj):
    t = jnp.matmul(batch, proj)                     # (B, S, R)
    diffs = t[:, :, None, :] - t[:, None, :, :]     # (B, S, S, R)
    return jnp.sum(diffs ** 2, axis=-1)             # (B, S, S)


if __name__ == "__main__":
    key = jax.random.PRNGKey(0)
    k_x, k_p, k_x2, k_p2 = jax.random.split(key, 4)

    # Module-default tiny shapes: hidden_dim=32, probe_rank=16, batch=2, seq=8.
    B, S, D, R = 2, 8, 32, 16
    batch = jax.random.normal(k_x, (B, S, D), dtype=jnp.float32)
    # nn.init.uniform_(proj, -0.05, 0.05) — deterministic synthetic init.
    proj = jax.random.uniform(k_p, (D, R), minval=-0.05, maxval=0.05,
                              dtype=jnp.float32)
    out = jax.block_until_ready(two_word_psd_probe(batch, proj))
    ref = jax.block_until_ready(reference(batch, proj))
    assert out.shape == (B, S, S)
    assert jnp.allclose(out, ref, atol=1e-4, rtol=1e-4), \
        float(jnp.max(jnp.abs(out - ref)))

    # Also exercise the tiled two-stage Gram-identity path, incl. S-padding
    # (S=192 is not a multiple of 128).  Slightly looser tolerance: the Gram
    # identity trades a little absolute precision for MXU throughput.
    B2, S2, D2, R2 = 2, 192, 64, 16
    batch2 = jax.random.normal(k_x2, (B2, S2, D2), dtype=jnp.float32)
    proj2 = jax.random.uniform(k_p2, (D2, R2), minval=-0.05, maxval=0.05,
                               dtype=jnp.float32)
    out2 = jax.block_until_ready(two_word_psd_probe(batch2, proj2))
    ref2 = jax.block_until_ready(reference(batch2, proj2))
    assert out2.shape == (B2, S2, S2)
    assert jnp.allclose(out2, ref2, atol=1e-3, rtol=1e-3), \
        float(jnp.max(jnp.abs(out2 - ref2)))

    print("KERNEL_OK")
</pallas_src>

<mosaic_0001>
module attributes {stable_mosaic.version = 11 : i64} {
  func.func @_fused_kernel(%arg0: i32, %arg1: memref<1x8x32xf32, #tpu.memory_space<vmem>>, %arg2: memref<32x16xf32, #tpu.memory_space<vmem>>, %arg3: memref<1x8x8xf32, #tpu.memory_space<vmem>>) attributes {dimension_semantics = [#tpu.dimension_semantics<parallel>], iteration_bounds = array<i64: 2>, scalar_prefetch = 0 : i64, scratch_operands = 0 : i64, tpu.core_type = #tpu.core_type<tc>, window_params = [{transform_indices = @transform_0, window_bounds = array<i64: 1, 8, 32>}, {pipeline_mode = #tpu.pipeline_mode<synchronous>, transform_indices = @transform_1, window_bounds = array<i64: 32, 16>}, {transform_indices = @transform_2, window_bounds = array<i64: 1, 8, 8>}]} {
    %c0 = arith.constant 0 : index
    %c0_0 = arith.constant 0 : index
    %c0_1 = arith.constant 0 : index
    %0 = vector.load %arg1[%c0, %c0_0, %c0_1] : memref<1x8x32xf32, #tpu.memory_space<vmem>>, vector<1x8x32xf32>
    %1 = vector.shape_cast %0 : vector<1x8x32xf32> to vector<8x32xf32>
    %c0_2 = arith.constant 0 : index
    %c0_3 = arith.constant 0 : index
    %2 = vector.load %arg2[%c0_2, %c0_3] : memref<32x16xf32, #tpu.memory_space<vmem>>, vector<32x16xf32>
    %cst = arith.constant dense<0.000000e+00> : vector<8x16xf32>
    %3 = tpu.matmul %1, %2, %cst {dimension_numbers = #tpu.dot_dimension_numbers<[1], [0], [0], [1], [0, 0, 1, 1], [], []>} : vector<8x32xf32>, vector<32x16xf32>, vector<8x16xf32> -> vector<8x16xf32>
    %4 = vector.shape_cast %3 : vector<8x16xf32> to vector<8x1x16xf32>
    %5 = vector.shape_cast %3 : vector<8x16xf32> to vector<1x8x16xf32>
    %6 = vector.broadcast %4 : vector<8x1x16xf32> to vector<8x8x16xf32>
    %7 = vector.broadcast %5 : vector<1x8x16xf32> to vector<8x8x16xf32>
    %8 = arith.subf %6, %7 : vector<8x8x16xf32>
    %9 = arith.mulf %8, %8 : vector<8x8x16xf32>
    %cst_4 = arith.constant dense<0.000000e+00> : vector<8x8xf32>
    %10 = vector.multi_reduction <add>, %9, %cst_4 [2] : vector<8x8x16xf32> to vector<8x8xf32>
    %c0_5 = arith.constant 0 : index
    %c0_6 = arith.constant 0 : index
    %c0_7 = arith.constant 0 : index
    %11 = vector.load %arg3[%c0_5, %c0_6, %c0_7] : memref<1x8x8xf32, #tpu.memory_space<vmem>>, vector<1x8x8xf32>
    %12 = vector.shape_cast %11 : vector<1x8x8xf32> to vector<8x8xf32>
    %13 = vector.shape_cast %10 : vector<8x8xf32> to vector<1x8x8xf32>
    tpu.vector_store %arg3[%c0_5, %c0_6, %c0_7], %13 {strides = array<i32>} : memref<1x8x8xf32, #tpu.memory_space<vmem>>, vector<1x8x8xf32>,
    return
  }
  func.func @transform_0(%arg0: i32) -> (i32, i32, i32) {
    %c0_i32 = arith.constant 0 : i32
    %c0_i32_0 = arith.constant 0 : i32
    %c0_i32_1 = arith.constant 0 : i32
    return %arg0, %c0_i32, %c0_i32_0 : i32, i32, i32
  }
  func.func @transform_1(%arg0: i32) -> (i32, i32) {
    %c0_i32 = arith.constant 0 : i32
    %c0_i32_0 = arith.constant 0 : i32
    %c0_i32_1 = arith.constant 0 : i32
    return %c0_i32, %c0_i32_0 : i32, i32
  }
  func.func @transform_2(%arg0: i32) -> (i32, i32, i32) {
    %c0_i32 = arith.constant 0 : i32
    %c0_i32_0 = arith.constant 0 : i32
    %c0_i32_1 = arith.constant 0 : i32
    return %arg0, %c0_i32, %c0_i32_0 : i32, i32, i32
  }
}

</mosaic_0001>

<llo_original>
// kernel: tpu_custom_call.1
$region0: #{tpu_custom_call.1}
  #allocation0 [shape = 'u32[]', space=smem, size = 0x4, offset = 0x4, fixed_abs, tag = 'smem constant byte address 0x4 - core index']
  #allocation1 [shape = 'u32[144,128]{1,0:T(1,128)}', space=vmem, size = 0x12000, scoped, tag = 'internal scratch']
  %s0 = inlined_call_operand.vmem [shape: f32[2,8,32], index: 0, kind: input, shape index: {}]
  %s1 = inlined_call_operand.vmem [shape: f32[32,16], index: 1, kind: input, shape index: {}]
  %s2 = inlined_call_operand.hbm [shape: f32[2,8,8], index: 2, kind: output, shape index: {}]
  %s3 = sld [smem:[#allocation0]]
  $region41: #{tpu_custom_call.1} parent=0
    _
  %s5 = ssub.s32 1, %s3
  %s6 = scalar_select 0, %s5, %s3
  $region1: #{tpu_custom_call.1} parent=0
    #allocation2 [shape = 'u8[8192]{0}', space=vmem, size = 0x2000, scoped, tag = 'output window, operand 0']
    #allocation3 [shape = 's32[2]{0}', space=sflag, size = 0x8, scoped, tag = 'scoped memory for tpu_custom_call.1']
    %7 = vsyncpa [#allocation3], 0
    %s8 = scalar_lea.sflag [#allocation3], 1
    %9 = vsyncpa %s8, 0
    loop: start=0, step=1, limit=4
    $region2: #{tpu_custom_call.1} parent=1 // loop_pre_header
      _
    $region3: #{tpu_custom_call.1} parent=1 // loop_header
      %s11 = sphi 0, %s15
      %p12 = scmp.ge.s32.totalorder %s11, 4
      %s21 = sphi 0, %s23
      %s24 = sphi 0, %s21
      %s25 = sphi 0, %s24
      %s41 = sphi 0, %s25
      %s45 = sphi 0, %s45
      %s47 = sphi 0, %s45
      %s48 = sphi 0, %s47
      %s62 = sphi 0, %s48
      %s68 = sphi 0, %s70
      %s71 = sphi 0, %s68
      %s72 = sphi 0, %s71
      %s88 = sphi 0, %s72
    $region4: #{tpu_custom_call.1} parent=1 // loop_header_branch
      %14 = sbr.rel (%p12) target = $region8
    $region5: #{tpu_custom_call.1} parent=1 // loop_body
      %s16 = ssub.s32 %s11, 1
      %s17 = ssub.s32 %s11, 2
      %s18 = sadd.s32 %s11, 1
      %s19 = ssub.s32 %s11, %s18
      %p20 = scmp.eq.s32.totalorder %s19, 0
      %s22 = sadd.s32 %s21, 1
      %s23 = scalar_select %p20, %s21, %s22
      %p26 = pneg %p20
      %p27 = scmp.eq.s32.totalorder %s11, 1
      %p28 = por %p26, %p27
      %p29 = scmp.ne.s32.totalorder %s21, %s24
      %p30 = scmp.eq.s32.totalorder %s11, 0
      %p31 = por %p29, %p30
      %p32 = scmp.ne.s32.totalorder %s21, %s24
      %p33 = scmp.eq.s32.totalorder %s16, 1
      %p34 = por %p32, %p33
      %p35 = scmp.ne.s32.totalorder %s24, %s25
      %p36 = scmp.eq.s32.totalorder %s16, 0
      %p37 = por %p35, %p36
      %p38 = scmp.ne.s32.totalorder %s24, %s25
      %p39 = scmp.eq.s32.totalorder %s17, 1
      %p40 = por %p38, %p39
      %p42 = scmp.ne.s32.totalorder %s25, %s41
      %p43 = scmp.eq.s32.totalorder %s17, 0
      %p44 = por %p42, %p43
      %s46 = sadd.s32 %s45, 1
      %p49 = scmp.eq.s32.totalorder %s11, 1
      %p50 = scmp.ne.s32.totalorder %s45, %s47
      %p51 = scmp.eq.s32.totalorder %s11, 0
      %p52 = por %p50, %p51
      %p53 = scmp.ne.s32.totalorder %s45, %s47
      %p54 = scmp.eq.s32.totalorder %s16, 1
      %p55 = por %p53, %p54
      %p56 = scmp.ne.s32.totalorder %s47, %s48
      %p57 = scmp.eq.s32.totalorder %s16, 0
      %p58 = por %p56, %p57
      %p59 = scmp.ne.s32.totalorder %s47, %s48
      %p60 = scmp.eq.s32.totalorder %s17, 1
      %p61 = por %p59, %p60
      %p63 = scmp.ne.s32.totalorder %s48, %s62
      %p64 = scmp.eq.s32.totalorder %s17, 0
      %p65 = por %p63, %p64
      %s66 = ssub.s32 %s11, %s18
      %p67 = scmp.eq.s32.totalorder %s66, 0
      %s69 = sadd.s32 %s68, 1
      %s70 = scalar_select %p67, %s68, %s69
      %p73 = pneg %p67
      %p74 = scmp.eq.s32.totalorder %s11, 1
      %p75 = por %p73, %p74
      %p76 = scmp.ne.s32.totalorder %s68, %s71
      %p77 = scmp.eq.s32.totalorder %s11, 0
      %p78 = por %p76, %p77
      %p79 = scmp.ne.s32.totalorder %s68, %s71
      %p80 = scmp.eq.s32.totalorder %s16, 1
      %p81 = por %p79, %p80
      %p82 = scmp.ne.s32.totalorder %s71, %s72
      %p83 = scmp.eq.s32.totalorder %s16, 0
      %p84 = por %p82, %p83
      %p85 = scmp.ne.s32.totalorder %s71, %s72
      %p86 = scmp.eq.s32.totalorder %s17, 1
      %p87 = por %p85, %p86
      %p89 = scmp.ne.s32.totalorder %s72, %s88
      %p90 = scmp.eq.s32.totalorder %s17, 0
      %p91 = por %p89, %p90
      %p92 = scmp.le.s32.totalorder 1, %s11
      %p93 = scmp.lt.s32.totalorder %s11, 3
      %p94 = pnand %p92, %p93
      %p95 = pneg %p94
      // Predicated region
      $region9: #{tpu_custom_call.1} parent=5 // pred_check
        _
      $region10: #{tpu_custom_call.1} parent=5 // pred_check_branch
        %97 = sbr.rel (%p94) target = $region12
      $region11: #{tpu_custom_call.1} parent=5 // pred_region
        %s98 = ssub.s32 %s11, 1
        // Predicated region
        $region13: #{tpu_custom_call.1} parent=11 // pred_check
          %p99 = pneg %p58
        $region14: #{tpu_custom_call.1} parent=11 // pred_check_branch
          %101 = sbr.rel (%p99) target = $region16
        $region15: #{tpu_custom_call.1} parent=11 // pred_region
          _
        $region16: #{tpu_custom_call.1} parent=11 // pred_fallthru
          _
      $region12: #{tpu_custom_call.1} parent=5 // pred_fallthru
        _
      %p102 = scmp.lt.s32.totalorder %s11, 2
      // Predicated region
      $region17: #{tpu_custom_call.1} parent=5 // pred_check
        %p103 = pneg %p102
      $region18: #{tpu_custom_call.1} parent=5 // pred_check_branch
        %105 = sbr.rel (%p103) target = $region20
      $region19: #{tpu_custom_call.1} parent=5 // pred_region
        // Predicated region
        $region21: #{tpu_custom_call.1} parent=19 // pred_check
          %p106 = pneg %p31
        $region22: #{tpu_custom_call.1} parent=19 // pred_check_branch
          %108 = sbr.rel (%p106) target = $region24
        $region23: #{tpu_custom_call.1} parent=19 // pred_region
          %p109 = scmp.lt.s32.totalorder %s11, 1
          %s110 = scalar_select %p109, %s11, 1
          %s111 = smul.addr %s110, 8
          %s112 = scalar_lea.vmem %s0, %s111
        $region24: #{tpu_custom_call.1} parent=19 // pred_fallthru
          _
      $region20: #{tpu_custom_call.1} parent=5 // pred_fallthru
        _
      %p113 = scmp.le.s32.totalorder 1, %s11
      %p114 = scmp.lt.s32.totalorder %s11, 3
      %p115 = pnand %p113, %p114
      %p116 = pneg %p115
      // Predicated region
      $region25: #{tpu_custom_call.1} parent=5 // pred_check
        _
      $region26: #{tpu_custom_call.1} parent=5 // pred_check_branch
        %118 = sbr.rel (%p115) target = $region28
      $region27: #{tpu_custom_call.1} parent=5 // pred_region
        %s119 = ssub.s32 %s11, 1
        %p120 = scmp.lt.s32.totalorder %s16, 1
        %s121 = scalar_select %p120, %s16, 1
        %s122 = smul.addr %s121, 8
        %s123 = scalar_lea.vmem %s0, %s122
        %p124 = pneg %p37
        %p125 = pneg %p34
        %p126 = pneg %p58
        %p127 = pneg %p55
        %p128 = pneg %p84
        %p129 = pneg %p81
        %s130 = sand.u32 %s71, 1
        %s131 = scalar_lea.sflag [#allocation3], %s130
        %s132 = sand.u32 %s71, 1
        %s133 = smul.addr %s132, 8
        %s134 = scalar_lea.vmem [#allocation2], %s133
        %p135 = scmp.lt.s32.totalorder %s16, 1
        %s136 = scalar_select %p135, %s16, 1
        %s137 = smul.addr %s136, 8
        %s138 = scalar_lea.vmem %s0, %s137
        %v139 = vld [vmem:[%s138] sm:$0xff]
        %v140 = vld [vmem:[%s1] sm:$0xff]
        %v141 = vld [vmem:[%s1 + $0x8] sm:$0xff]
        %v142 = vld [vmem:[%s1 + $0x10] sm:$0xff]
        %v143 = vld [vmem:[%s1 + $0x18] sm:$0xff]
        %vm144 = vcmask 261120
        %v146 = vsel %vm144, %v139, 0
        %148 = vmatprep.subr.mxu0 0.0
        %149 = vmatpush1.msra.mxu0 %v140
        %150 = vmatprep.subr.mxu0 0.0
        %151 = vmatpush1.msra.mxu0 %v141
        %152 = vmatprep.subr.mxu0 0.0
        %153 = vmatpush1.msra.mxu0 %v142
        %154 = vmatprep.subr.mxu0 0.0
        %155 = vmatpush1.msra.mxu0 %v143
        %156 = vmatprep.subr.mxu0 0.0
        %157 = vmatpush1.msra.mxu0 0.0
        %158 = vmatprep.subr.mxu0 0.0
        %159 = vmatpush1.msra.mxu0 0.0
        %160 = vmatprep.subr.mxu0 0.0
        %161 = vmatpush1.msra.mxu0 0.0
        %162 = vmatprep.subr.mxu0 0.0
        %163 = vmatpush1.msra.mxu0 0.0
        %164 = vmatprep.subr.mxu0 0.0
        %165 = vmatpush1.msra.mxu0 0.0
        %166 = vmatprep.subr.mxu0 0.0
        %167 = vmatpush1.msra.mxu0 0.0
        %168 = vmatprep.subr.mxu0 0.0
        %169 = vmatpush1.msra.mxu0 0.0
        %170 = vmatprep.subr.mxu0 0.0
        %171 = vmatpush1.msra.mxu0 0.0
        %172 = vmatprep.subr.mxu0 0.0
        %173 = vmatpush1.msra.mxu0 0.0
        %174 = vmatprep.subr.mxu0 0.0
        %175 = vmatpush1.msra.mxu0 0.0
        %176 = vmatprep.subr.mxu0 0.0
        %177 = vmatpush1.msra.mxu0 0.0
        %178 = vmatprep.subr.mxu0 0.0
        %179 = vmatpush1.msra.mxu0 0.0
        %180 = vmatprep.subr.mxu0 0.0
        %181 = vmatpush1.msra.mxu0 0.0
        %182 = vmatprep.subr.mxu0 0.0
        %183 = vmatpush1.msra.mxu0 0.0
        %184 = vmatprep.subr.mxu0 0.0
        %185 = vmatpush1.msra.mxu0 0.0
        %186 = vmatprep.subr.mxu0 0.0
        %187 = vmatpush1.msra.mxu0 0.0
        %188 = vmatprep.subr.mxu0 0.0
        %189 = vmatpush1.msra.mxu0 0.0
        %190 = vmatprep.subr.mxu0 0.0
        %191 = vmatpush1.msra.mxu0 0.0
        %192 = vmatprep.subr.mxu0 0.0
        %193 = vmatpush1.msra.mxu0 0.0
        %194 = vmatprep.subr.mxu0 0.0
        %195 = vmatpush1.msra.mxu0 0.0
        %196 = vmatprep.subr.mxu0 0.0
        %197 = vmatpush1.msra.mxu0 0.0
        %198 = vmatprep.subr.mxu0 0.0
        %199 = vmatpush1.msra.mxu0 0.0
        %200 = vmatprep.subr.mxu0 0.0
        %201 = vmatpush1.msra.mxu0 0.0
        %202 = vmatprep.subr.mxu0 0.0
        %203 = vmatpush1.msra.mxu0 0.0
        %204 = vmatprep.subr.mxu0 0.0
        %205 = vmatpush1.msra.mxu0 0.0
        %206 = vmatprep.subr.mxu0 0.0
        %207 = vmatpush1.msra.mxu0 0.0
        %208 = vmatprep.subr.mxu0 0.0
        %209 = vmatpush1.msra.mxu0 0.0
        %210 = vmatprep.subr.mxu0 0.0
        %211 = vmatpush1.msra.mxu0 0.0
        %212 = vmatprep.mubr.f32.mxu0 0.0
        %213 = vmatmul.mubr.f32.gmra.mrb[0].mxu0 %v146
        %v214 = vpop.f32.mrb[0].mxu0
        %v215 = vadd.f32 0.0, %v214
        %v216 = vpop.f32.mrb[0].mxu0
        %217 = vdwg.mxu0
        %v219 = vcombine.high %v215, %v215
        %v221 = vunpack.c.l.s4 1966171168
        %v222 = vunpack.c.0.s8 %v221
        %v223 = vlaneseq
        %v224 = vshrl.u32 %v223, 7
        %v225 = vsub.s32 %v222, %v224
        %v226 = vrot.slane %v215, %v225
        %v228 = vunpack.c.l.s4 1966171168
        %v229 = vunpack.c.0.s8 %v228
        %v230 = vlaneseq
        %v231 = vshrl.u32 %v230, 7
        %v232 = vsub.s32 %v229, %v231
        %v233 = vrot.slane %v219, %v232
        %v234 = vcombine.high %v226, %v226
        %v235 = vcombine.high %v233, %v233
        %v237 = vunpack.c.l.s4 1966171168
        %v238 = vunpack.c.0.s8 %v237
        %v239 = vlaneseq
        %v240 = vshrl.u32 %v239, 7
        %v241 = vsub.s32 %v238, %v240
        %v242 = vrot.slane %v226, %v241
        %v244 = vunpack.c.l.s4 1966171168
        %v245 = vunpack.c.0.s8 %v244
        %v246 = vlaneseq
        %v247 = vshrl.u32 %v246, 7
        %v248 = vsub.s32 %v245, %v247
        %v249 = vrot.slane %v233, %v248
        %v251 = vunpack.c.l.s4 1966171168
        %v252 = vunpack.c.0.s8 %v251
        %v253 = vlaneseq
        %v254 = vshrl.u32 %v253, 7
        %v255 = vsub.s32 %v252, %v254
        %v256 = vrot.slane %v234, %v255
        %v258 = vunpack.c.l.s4 1966171168
        %v259 = vunpack.c.0.s8 %v258
        %v260 = vlaneseq
        %v261 = vshrl.u32 %v260, 7
        %v262 = vsub.s32 %v259, %v261
        %v263 = vrot.slane %v235, %v262
        %v264 = vcombine.high %v242, %v242
        %v265 = vcombine.high %v249, %v249
        %v266 = vcombine.high %v256, %v256
        %v267 = vcombine.high %v263, %v263
        %v268 = vlaneseq
        %v269 = vshrl.u32 %v268, 7
        %v270 = vsub.s32 0, %v269
        %v271 = vrot.slane %v242, %v270
        %v272 = vlaneseq
        %v273 = vshrl.u32 %v272, 7
        %v274 = vsub.s32 0, %v273
        %v275 = vrot.slane %v256, %v274
        %v276 = vlaneseq
        %v277 = vshrl.u32 %v276, 7
        %v278 = vsub.s32 0, %v277
        %v279 = vrot.slane %v264, %v278
        %v280 = vlaneseq
        %v281 = vshrl.u32 %v280, 7
        %v282 = vsub.s32 0, %v281
        %v283 = vrot.slane %v266, %v282
        %v284 = vlaneseq
        %v285 = vshrl.u32 %v284, 7
        %v286 = vsub.s32 0, %v285
        %v287 = vrot.slane %v249, %v286
        %v288 = vlaneseq
        %v289 = vshrl.u32 %v288, 7
        %v290 = vsub.s32 0, %v289
        %v291 = vrot.slane %v263, %v290
        %v292 = vlaneseq
        %v293 = vshrl.u32 %v292, 7
        %v294 = vsub.s32 0, %v293
        %v295 = vrot.slane %v265, %v294
        %v296 = vlaneseq
        %v297 = vshrl.u32 %v296, 7
        %v298 = vsub.s32 0, %v297
        %v299 = vrot.slane %v267, %v298
        %v308 = vsub.f32 %v271, %v215
        %v309 = vsub.f32 %v275, %v215
        %v310 = vsub.f32 %v279, %v215
        %v311 = vsub.f32 %v283, %v215
        %v312 = vsub.f32 %v287, %v215
        %v313 = vsub.f32 %v291, %v215
        %v314 = vsub.f32 %v295, %v215
        %v315 = vsub.f32 %v299, %v215
        %v316 = vmul.f32 %v308, %v308
        %v317 = vmul.f32 %v309, %v309
        %v318 = vmul.f32 %v310, %v310
        %v319 = vmul.f32 %v311, %v311
        %v320 = vmul.f32 %v312, %v312
        %v321 = vmul.f32 %v313, %v313
        %v322 = vmul.f32 %v314, %v314
        %v323 = vmul.f32 %v315, %v315
        %vm324 = vcmask 130048
        %v325 = vsel %vm324, %v316, 0.0
        %326 = vadd.xlane.f32.xlu0 %v325
        %v327 = vpop.xlane.xlu0 %326
        %v328 = vsel %vm324, %v317, 0.0
        %329 = vadd.xlane.f32.xlu0 %v328
        %v330 = vpop.xlane.xlu0 %329
        %v331 = vsel %vm324, %v318, 0.0
        %332 = vadd.xlane.f32.xlu0 %v331
        %v333 = vpop.xlane.xlu0 %332
        %v334 = vsel %vm324, %v319, 0.0
        %335 = vadd.xlane.f32.xlu0 %v334
        %v336 = vpop.xlane.xlu0 %335
        %v337 = vsel %vm324, %v320, 0.0
        %338 = vadd.xlane.f32.xlu0 %v337
        %v339 = vpop.xlane.xlu0 %338
        %v340 = vsel %vm324, %v321, 0.0
        %341 = vadd.xlane.f32.xlu0 %v340
        %v342 = vpop.xlane.xlu0 %341
        %v343 = vsel %vm324, %v322, 0.0
        %344 = vadd.xlane.f32.xlu0 %v343
        %v345 = vpop.xlane.xlu0 %344
        %v346 = vsel %vm324, %v323, 0.0
        %347 = vadd.xlane.f32.xlu0 %v346
        %v348 = vpop.xlane.xlu0 %347
        %v357 = vlaneseq
        %v358 = vand.u32 %v357, 127
        %v359 = vlaneseq
        %v360 = vshrl.u32 %v359, 7
        %v361 = vsub.s32 %v358, %v360
        %v362 = vrot.slane %v327, %v361
        %v363 = vlaneseq
        %v364 = vshrl.u32 %v363, 7
        %v365 = vsub.s32 %v358, %v364
        %v366 = vrot.slane %v330, %v365
        %v367 = vlaneseq
        %v368 = vshrl.u32 %v367, 7
        %v369 = vsub.s32 %v358, %v368
        %v370 = vrot.slane %v333, %v369
        %v371 = vlaneseq
        %v372 = vshrl.u32 %v371, 7
        %v373 = vsub.s32 %v358, %v372
        %v374 = vrot.slane %v336, %v373
        %v375 = vlaneseq
        %v376 = vshrl.u32 %v375, 7
        %v377 = vsub.s32 %v358, %v376
        %v378 = vrot.slane %v339, %v377
        %v379 = vlaneseq
        %v380 = vshrl.u32 %v379, 7
        %v381 = vsub.s32 %v358, %v380
        %v382 = vrot.slane %v342, %v381
        %v383 = vlaneseq
        %v384 = vshrl.u32 %v383, 7
        %v385 = vsub.s32 %v358, %v384
        %v386 = vrot.slane %v345, %v385
        %v387 = vlaneseq
        %v388 = vshrl.u32 %v387, 7
        %v389 = vsub.s32 %v358, %v388
        %v390 = vrot.slane %v348, %v389
        %vm391 = vcmask 1041409
        %v392 = vsel %vm391, %v366, %v362
        %vm393 = vcmask 1042434
        %v394 = vsel %vm393, %v370, %v392
        %vm395 = vcmask 1043459
        %v396 = vsel %vm395, %v374, %v394
        %vm397 = vcmask 1044484
        %v398 = vsel %vm397, %v378, %v396
        %vm399 = vcmask 1045509
        %v400 = vsel %vm399, %v382, %v398
        %vm401 = vcmask 1046534
        %v402 = vsel %vm401, %v386, %v400
        %vm403 = vcmask 1047559
        %v404 = vsel %vm403, %v390, %v402
        %vm406 = vcmask 64512
        %407 = vst.msk [vmem:[%s134] sm:$0xff] %vm406, %v404
        %s408 = sand.u32 %s71, 1
        %s409 = scalar_lea.sflag [#allocation3], %s408
        %s410 = sand.u32 %s71, 1
        %s411 = smul.addr %s410, 8
        %s412 = scalar_lea.vmem [#allocation2], %s411
        // Predicated region
        $region29: #{tpu_custom_call.1} parent=27 // pred_check
          %p413 = pneg %p81
        $region30: #{tpu_custom_call.1} parent=27 // pred_check_branch
          %415 = sbr.rel (%p413) target = $region32
        $region31: #{tpu_custom_call.1} parent=27 // pred_region
          %s417 = ssub.s32 128, 128
          %418 = vsyncadd %s409, %s417
          %s419 = smul.addr %s16, 128
          %s420 = scalar_lea.hbm %s2, %s419
          %s422 = sshll.u32 %s412, 4
          %s423 = int_to_ptr.vmem [resolvable:$true] %s422
          %425 = dma.vmem_to_hbm [thread:$0]  %s423, 128, %s420, %s409
        $region32: #{tpu_custom_call.1} parent=27 // pred_fallthru
          _
      $region28: #{tpu_custom_call.1} parent=5 // pred_fallthru
        _
      %p426 = scmp.le.s32.totalorder 2, %s11
      // Predicated region
      $region33: #{tpu_custom_call.1} parent=5 // pred_check
        %p427 = pneg %p426
      $region34: #{tpu_custom_call.1} parent=5 // pred_check_branch
        %429 = sbr.rel (%p427) target = $region36
      $region35: #{tpu_custom_call.1} parent=5 // pred_region
        %s430 = ssub.s32 %s11, 2
        // Predicated region
        $region37: #{tpu_custom_call.1} parent=35 // pred_check
          %p431 = pneg %p87
        $region38: #{tpu_custom_call.1} parent=35 // pred_check_branch
          %433 = sbr.rel (%p431) target = $region40
        $region39: #{tpu_custom_call.1} parent=35 // pred_region
          %s434 = sand.u32 %s72, 1
          %s435 = scalar_lea.sflag [#allocation3], %s434
          %s436 = sand.u32 %s72, 1
          %s437 = smul.addr %s436, 8
          %s438 = scalar_lea.vmem [#allocation2], %s437
          %439 = dma.done %s435, 128
        $region40: #{tpu_custom_call.1} parent=35 // pred_fallthru
          _
      $region36: #{tpu_custom_call.1} parent=5 // pred_fallthru
        _
    $region6: #{tpu_custom_call.1} parent=1 // loop_footer
      %s15 = sadd.s32 1, %s11
    $region7: #{tpu_custom_call.1} parent=1 // loop_footer_branch
      %10 = sbr.rel target = $region3
    $region8: #{tpu_custom_call.1} parent=1 // loop_exit
      _
    %440 = vsyncpa [#allocation3], 1
    %s441 = scalar_lea.sflag [#allocation3], 1
    %442 = vsyncpa %s441, 1

</llo_original>
